<compile_context>
chip_gen: v7x
topology: tpu7x:2x2x1
jax: 0.10.0
libtpu: 0.0.40
codegen_flags: <defaults>
</compile_context>

<pallas_src>
import jax
import jax.numpy as jnp
from jax.experimental import pallas as pl
from jax.experimental.pallas import tpu as pltpu

_LANE = 128
_TB_MAX = 4096


def _round_up(n, m):
    return ((n + m - 1) // m) * m


def _cdiv(a, b):
    return (a + b - 1) // b


def _pick_batch_tile(B, D_in, H_pad, itemsize):
    """Batch-tile size: large tiles to amortize per-grid-step overhead,
    >=2 grid steps when B > 128 (so v7x's 2 TensorCores both get work),
    lane-multiple tiles for unmasked stores, and a VMEM cap so the
    double-buffered x tiles + f32 hidden intermediate stay well under the
    32 MiB default scoped VMEM limit on every generation (incl. v7x)."""
    if B <= _LANE:
        return B  # single full-batch tile (block dim == full array dim is legal)
    tb = min(_TB_MAX, _round_up(_cdiv(B, 2), _LANE))
    rows_x = (4 << 20) // max(1, D_in * itemsize)   # ~4 MiB per x buffer
    rows_h = (8 << 20) // max(1, H_pad * 4)         # ~8 MiB for f32 hidden
    cap = max(_LANE, (min(rows_x, rows_h) // _LANE) * _LANE)
    return max(_LANE, min(tb, cap))


def _mlp_kernel(x_ref, w1_ref, bw_ref, b2_ref, o_ref):
    # x_ref : [TB, D_in]     unpadded feature dim (== full array last dim)
    # w1_ref: [D_in, H_pad]  only the hidden dim is lane-padded
    # bw_ref: [2, H_pad]     row 0 = b1, row 1 = w2[:, 0]   (f32)
    # b2_ref: [1, 1]         f32
    # o_ref : [1, TB]        lane-dense output: batch on the lane axis
    h = jnp.dot(x_ref[...], w1_ref[...],
                preferred_element_type=jnp.float32)          # MXU
    h = jnp.maximum(h + bw_ref[0:1, :], 0.0)                 # bias + ReLU (VPU)
    # Layer 2 (out_features == 1): VPU multiply + lane reduction (XLU slot),
    # cheaper than a nearly-empty N=1 MXU matmul.
    row = jnp.sum(h * bw_ref[1:2, :], axis=-1)               # [TB]
    o_ref[...] = (row[None, :] + b2_ref[...]).astype(o_ref.dtype)


def prepare_params(w1, b1, w2, b2, *, compute_dtype=jnp.float32):
    """One-time parameter prep, hoisted out of the per-call forward.

    w1: [D_in, H] (already transposed vs. PyTorch's [out, in]), b1: [H],
    w2: [H, 1], b2: [1].
    Only pass compute_dtype=jnp.bfloat16 if x will also arrive in bf16
    (otherwise the f32 x read dominates and nothing is saved)."""
    _, H = w1.shape
    H_pad = _round_up(H, _LANE)
    w1p = jnp.pad(w1, ((0, 0), (0, H_pad - H))).astype(compute_dtype)
    bw = jnp.stack([jnp.pad(b1, (0, H_pad - H)),
                    jnp.pad(w2[:, 0], (0, H_pad - H))]).astype(jnp.float32)
    b2p = b2.reshape(1, 1).astype(jnp.float32)
    return w1p, bw, b2p


def classifier_forward(x, params):
    """Forward pass. x: [B, D_in] (f32 or bf16). Returns [B, 1] float32."""
    w1p, bw, b2p = params
    B, D_in = x.shape
    H_pad = w1p.shape[1]

    TB = _pick_batch_tile(B, D_in, H_pad, x.dtype.itemsize)
    num_tiles = _cdiv(B, TB)

    out = pl.pallas_call(
        _mlp_kernel,
        out_shape=jax.ShapeDtypeStruct((1, B), jnp.float32),
        grid_spec=pl.GridSpec(
            grid=(num_tiles,),
            in_specs=[
                # x: streamed per batch tile, unpadded, auto double-buffered.
                pl.BlockSpec((TB, D_in), lambda i: (i, 0)),
                # Weights / packed (b1, w2): constant maps -> VMEM-resident.
                pl.BlockSpec((D_in, H_pad), lambda i: (0, 0)),
                pl.BlockSpec((2, H_pad), lambda i: (0, 0)),
                pl.BlockSpec((1, 1), lambda i: (0, 0)),
            ],
            # Lane-dense output: batch lives on the lane axis.
            out_specs=pl.BlockSpec((1, TB), lambda i: (0, i)),
        ),
        compiler_params=pltpu.CompilerParams(
            dimension_semantics=("parallel",)),
    )(x, w1p, bw, b2p)

    return out[0, :].reshape(B, 1)


def init_params(key, input_dim, hidden_dim):
    """Deterministic init mimicking torch.nn.Linear default
    (U[-1/sqrt(fan_in), 1/sqrt(fan_in)])."""
    k1, k2, k3, k4 = jax.random.split(key, 4)
    bound1 = 1.0 / jnp.sqrt(jnp.float32(input_dim))
    bound2 = 1.0 / jnp.sqrt(jnp.float32(hidden_dim))
    # Stored as [in_features, out_features] (transposed vs. PyTorch's [out, in]).
    w1 = jax.random.uniform(k1, (input_dim, hidden_dim), jnp.float32,
                            minval=-bound1, maxval=bound1)
    b1 = jax.random.uniform(k2, (hidden_dim,), jnp.float32,
                            minval=-bound1, maxval=bound1)
    w2 = jax.random.uniform(k3, (hidden_dim, 1), jnp.float32,
                            minval=-bound2, maxval=bound2)
    b2 = jax.random.uniform(k4, (1,), jnp.float32,
                            minval=-bound2, maxval=bound2)
    return w1, b1, w2, b2


if __name__ == "__main__":
    key = jax.random.PRNGKey(0)
    kx, kp, kx2, kx3 = jax.random.split(key, 4)

    B, INPUT_DIM, HIDDEN_DIM = 8, 16, 32
    x = jax.random.normal(kx, (B, INPUT_DIM), jnp.float32)
    w1, b1, w2, b2 = init_params(kp, INPUT_DIM, HIDDEN_DIM)
    params = prepare_params(w1, b1, w2, b2)

    def ref_fn(xx):
        return jnp.maximum(xx @ w1 + b1, 0.0) @ w2 + b2

    # Small-batch path (single full-batch tile).
    out = classifier_forward(x, params)
    jax.block_until_ready(out)
    assert out.shape == (B, 1)
    assert jnp.allclose(out, ref_fn(x), atol=1e-5, rtol=1e-5)

    # Multi-tile pipelined path (>=2 grid steps -> both v7x TCs get work).
    B2 = 1024
    x2 = jax.random.normal(kx2, (B2, INPUT_DIM), jnp.float32)
    out2 = classifier_forward(x2, params)
    jax.block_until_ready(out2)
    assert out2.shape == (B2, 1)
    assert jnp.allclose(out2, ref_fn(x2), atol=1e-5, rtol=1e-5)

    # Ragged last batch tile (B not a multiple of the tile size).
    B3 = 1000
    x3 = jax.random.normal(kx3, (B3, INPUT_DIM), jnp.float32)
    out3 = classifier_forward(x3, params)
    jax.block_until_ready(out3)
    assert out3.shape == (B3, 1)
    assert jnp.allclose(out3, ref_fn(x3), atol=1e-5, rtol=1e-5)

    print("KERNEL_OK")
</pallas_src>

<mosaic_0001>
module attributes {stable_mosaic.version = 11 : i64} {
  func.func @_mlp_kernel(%arg0: i32, %arg1: memref<8x16xf32, #tpu.memory_space<vmem>>, %arg2: memref<16x128xf32, #tpu.memory_space<vmem>>, %arg3: memref<2x128xf32, #tpu.memory_space<vmem>>, %arg4: memref<1x1xf32, #tpu.memory_space<vmem>>, %arg5: memref<1x8xf32, #tpu.memory_space<vmem>>) attributes {dimension_semantics = [#tpu.dimension_semantics<parallel>], iteration_bounds = array<i64: 1>, scalar_prefetch = 0 : i64, scratch_operands = 0 : i64, tpu.core_type = #tpu.core_type<tc>, window_params = [{transform_indices = @transform_0, window_bounds = array<i64: 8, 16>}, {pipeline_mode = #tpu.pipeline_mode<synchronous>, transform_indices = @transform_1, window_bounds = array<i64: 16, 128>}, {pipeline_mode = #tpu.pipeline_mode<synchronous>, transform_indices = @transform_2, window_bounds = array<i64: 2, 128>}, {pipeline_mode = #tpu.pipeline_mode<synchronous>, transform_indices = @transform_3, window_bounds = array<i64: 1, 1>}, {transform_indices = @transform_4, window_bounds = array<i64: 1, 8>}]} {
    %c0 = arith.constant 0 : index
    %c0_0 = arith.constant 0 : index
    %0 = vector.load %arg1[%c0, %c0_0] : memref<8x16xf32, #tpu.memory_space<vmem>>, vector<8x16xf32>
    %c0_1 = arith.constant 0 : index
    %c0_2 = arith.constant 0 : index
    %1 = vector.load %arg2[%c0_1, %c0_2] : memref<16x128xf32, #tpu.memory_space<vmem>>, vector<16x128xf32>
    %cst = arith.constant dense<0.000000e+00> : vector<8x128xf32>
    %2 = tpu.matmul %0, %1, %cst {dimension_numbers = #tpu.dot_dimension_numbers<[1], [0], [0], [1], [0, 0, 1, 1], [], []>} : vector<8x16xf32>, vector<16x128xf32>, vector<8x128xf32> -> vector<8x128xf32>
    %c0_3 = arith.constant 0 : index
    %c0_4 = arith.constant 0 : index
    %3 = vector.load %arg3[%c0_3, %c0_4] : memref<2x128xf32, #tpu.memory_space<vmem>>, vector<1x128xf32>
    %4 = vector.broadcast %3 : vector<1x128xf32> to vector<8x128xf32>
    %5 = arith.addf %2, %4 : vector<8x128xf32>
    %cst_5 = arith.constant 0.000000e+00 : f32
    %6 = vector.broadcast %cst_5 : f32 to vector<8x128xf32>
    %7 = arith.maximumf %5, %6 : vector<8x128xf32>
    %c1 = arith.constant 1 : index
    %c0_6 = arith.constant 0 : index
    %8 = vector.load %arg3[%c1, %c0_6] : memref<2x128xf32, #tpu.memory_space<vmem>>, vector<1x128xf32>
    %9 = vector.broadcast %8 : vector<1x128xf32> to vector<8x128xf32>
    %10 = arith.mulf %7, %9 : vector<8x128xf32>
    %cst_7 = arith.constant dense<0.000000e+00> : vector<8xf32>
    %11 = vector.multi_reduction <add>, %10, %cst_7 [1] : vector<8x128xf32> to vector<8xf32>
    %12 = vector.shape_cast %11 : vector<8xf32> to vector<1x8xf32>
    %c0_8 = arith.constant 0 : index
    %c0_9 = arith.constant 0 : index
    %13 = vector.load %arg4[%c0_8, %c0_9] : memref<1x1xf32, #tpu.memory_space<vmem>>, vector<1x1xf32>
    %14 = vector.broadcast %13 : vector<1x1xf32> to vector<1x8xf32>
    %15 = arith.addf %12, %14 : vector<1x8xf32>
    %c0_10 = arith.constant 0 : index
    %c0_11 = arith.constant 0 : index
    %16 = vector.load %arg5[%c0_10, %c0_11] : memref<1x8xf32, #tpu.memory_space<vmem>>, vector<1x8xf32>
    tpu.vector_store %arg5[%c0_10, %c0_11], %15 {strides = array<i32>} : memref<1x8xf32, #tpu.memory_space<vmem>>, vector<1x8xf32>,
    return
  }
  func.func @transform_0(%arg0: i32) -> (i32, i32) {
    %c0_i32 = arith.constant 0 : i32
    %c0_i32_0 = arith.constant 0 : i32
    return %arg0, %c0_i32 : i32, i32
  }
  func.func @transform_1(%arg0: i32) -> (i32, i32) {
    %c0_i32 = arith.constant 0 : i32
    %c0_i32_0 = arith.constant 0 : i32
    %c0_i32_1 = arith.constant 0 : i32
    return %c0_i32, %c0_i32_0 : i32, i32
  }
  func.func @transform_2(%arg0: i32) -> (i32, i32) {
    %c0_i32 = arith.constant 0 : i32
    %c0_i32_0 = arith.constant 0 : i32
    %c0_i32_1 = arith.constant 0 : i32
    return %c0_i32, %c0_i32_0 : i32, i32
  }
  func.func @transform_3(%arg0: i32) -> (i32, i32) {
    %c0_i32 = arith.constant 0 : i32
    %c0_i32_0 = arith.constant 0 : i32
    %c0_i32_1 = arith.constant 0 : i32
    return %c0_i32, %c0_i32_0 : i32, i32
  }
  func.func @transform_4(%arg0: i32) -> (i32, i32) {
    %c0_i32 = arith.constant 0 : i32
    %c0_i32_0 = arith.constant 0 : i32
    return %c0_i32, %arg0 : i32, i32
  }
}

</mosaic_0001>

<llo_original>
// kernel: tpu_custom_call.1
$region0: #{tpu_custom_call.1}
  #allocation0 [shape = 'u32[]', space=smem, size = 0x4, offset = 0x4, fixed_abs, tag = 'smem constant byte address 0x4 - core index']
  #allocation1 [shape = 'u32[144,128]{1,0:T(1,128)}', space=vmem, size = 0x12000, scoped, tag = 'internal scratch']
  #allocation2 [shape = 'f32[1,1]{1,0:T(1,128)S(1)}', space=vmem, size = 0x200, scoped, tag = 'scoped memory for tpu_custom_call.1']
  %s0 = inlined_call_operand.hbm [shape: f32[8,16], index: 0, kind: input, shape index: {}]
  %s1 = inlined_call_operand.hbm [shape: f32[16,128], index: 1, kind: input, shape index: {}]
  %s2 = inlined_call_operand.vmem [shape: f32[2,128], index: 2, kind: input, shape index: {}]
  %s3 = inlined_call_operand.<no memory space> [shape: f32[1,1], index: 3, kind: input, shape index: {}]
  %s4 = inlined_call_operand.hbm [shape: f32[1,8], index: 4, kind: output, shape index: {}]
  %s5 = sld [smem:[#allocation0]]
  $region34: #{tpu_custom_call.1} parent=0
    _
  %s7 = ssub.s32 1, %s5
  %s8 = scalar_select 0, %s7, %s5
  %v9 = vstv %s3
  %10 = vst [vmem:[#allocation2] sm:$0x1] %v9
  $region1: #{tpu_custom_call.1} parent=0
    #allocation3 [shape = 'u8[4096]{0}', space=vmem, size = 0x1000, scoped, tag = 'input window, operand 0, single buffered']
    #allocation4 [shape = 's32[1]{0}', space=sflag, size = 0x4, scoped, tag = 'scoped memory for tpu_custom_call.1']
    #allocation5 [shape = 's32[1]{0}', space=sflag, size = 0x4, scoped, tag = 'scoped memory for tpu_custom_call.1']
    #allocation6 [shape = 'u8[8192]{0}', space=vmem, size = 0x2000, scoped, tag = 'input window, operand 1, single buffered']
    #allocation7 [shape = 's32[1]{0}', space=sflag, size = 0x4, scoped, tag = 'scoped memory for tpu_custom_call.1']
    #allocation8 [shape = 'u8[512]{0}', space=vmem, size = 0x400, scoped, tag = 'output window, operand 0, single buffered']
    %11 = vsyncpa [#allocation4], 0
    %12 = vsyncpa [#allocation7], 0
    %13 = vsyncpa [#allocation5], 0
    // Predicated region
    $region2: #{tpu_custom_call.1} parent=1 // pred_check
      _
    $region3: #{tpu_custom_call.1} parent=1 // pred_check_branch
      %15 = sbr.rel (0) target = $region5
    $region4: #{tpu_custom_call.1} parent=1 // pred_region
      %s17 = ssub.s32 128, 128
      %18 = vsyncadd [#allocation4], %s17
      %s20 = sshll.u32 [#allocation3], 4
      %s21 = int_to_ptr.vmem [resolvable:$true] %s20
      %23 = dma.hbm_to_vmem [thread:$0]  %s0, 128, %s21, [#allocation4]
    $region5: #{tpu_custom_call.1} parent=1 // pred_fallthru
      _
    // Predicated region
    $region6: #{tpu_custom_call.1} parent=1 // pred_check
      _
    $region7: #{tpu_custom_call.1} parent=1 // pred_check_branch
      %25 = sbr.rel (0) target = $region9
    $region8: #{tpu_custom_call.1} parent=1 // pred_region
      %s27 = ssub.s32 256, 256
      %28 = vsyncadd [#allocation7], %s27
      %s29 = sshll.u32 [#allocation6], 4
      %s30 = int_to_ptr.vmem [resolvable:$true] %s29
      %35 = dma.hbm_to_vmem [thread:$0]  %s1, 256, %s30, [#allocation7], 128, 128, 8
    $region9: #{tpu_custom_call.1} parent=1 // pred_fallthru
      _
    // Predicated region
    $region10: #{tpu_custom_call.1} parent=1 // pred_check
      _
    $region11: #{tpu_custom_call.1} parent=1 // pred_check_branch
      %37 = sbr.rel (0) target = $region13
    $region12: #{tpu_custom_call.1} parent=1 // pred_region
      _
    $region13: #{tpu_custom_call.1} parent=1 // pred_fallthru
      _
    // Predicated region
    $region14: #{tpu_custom_call.1} parent=1 // pred_check
      _
    $region15: #{tpu_custom_call.1} parent=1 // pred_check_branch
      %39 = sbr.rel (0) target = $region17
    $region16: #{tpu_custom_call.1} parent=1 // pred_region
      _
    $region17: #{tpu_custom_call.1} parent=1 // pred_fallthru
      _
    // Predicated region
    $region18: #{tpu_custom_call.1} parent=1 // pred_check
      _
    $region19: #{tpu_custom_call.1} parent=1 // pred_check_branch
      %41 = sbr.rel (0) target = $region21
    $region20: #{tpu_custom_call.1} parent=1 // pred_region
      %42 = dma.done [#allocation4], 128
    $region21: #{tpu_custom_call.1} parent=1 // pred_fallthru
      _
    // Predicated region
    $region22: #{tpu_custom_call.1} parent=1 // pred_check
      _
    $region23: #{tpu_custom_call.1} parent=1 // pred_check_branch
      %44 = sbr.rel (0) target = $region25
    $region24: #{tpu_custom_call.1} parent=1 // pred_region
      %45 = dma.done [#allocation7], 256
    $region25: #{tpu_custom_call.1} parent=1 // pred_fallthru
      _
    %v46 = vld [vmem:[#allocation3] sm:$0xff]
    %v47 = vld [vmem:[#allocation6] sm:$0xff]
    %v48 = vld [vmem:[#allocation6 + $0x8] sm:$0xff]
    %v49 = vld [vmem:[%s2] sm:$0x1]
    %v50 = vlaneseq
    %v51 = vshrl.u32 %v50, 7
    %v52 = vsub.s32 0, %v51
    %v53 = vrot.slane %v49, %v52
    %vm54 = vcmask 130048
    %v56 = vsel %vm54, %v46, 0
    %58 = vmatprep.subr.mxu0 0.0
    %59 = vmatpush1.msra.mxu0 %v47
    %60 = vmatprep.subr.mxu0 0.0
    %61 = vmatpush1.msra.mxu0 %v48
    %62 = vmatprep.subr.mxu0 0.0
    %63 = vmatpush1.msra.mxu0 0.0
    %64 = vmatprep.subr.mxu0 0.0
    %65 = vmatpush1.msra.mxu0 0.0
    %66 = vmatprep.subr.mxu0 0.0
    %67 = vmatpush1.msra.mxu0 0.0
    %68 = vmatprep.subr.mxu0 0.0
    %69 = vmatpush1.msra.mxu0 0.0
    %70 = vmatprep.subr.mxu0 0.0
    %71 = vmatpush1.msra.mxu0 0.0
    %72 = vmatprep.subr.mxu0 0.0
    %73 = vmatpush1.msra.mxu0 0.0
    %74 = vmatprep.subr.mxu0 0.0
    %75 = vmatpush1.msra.mxu0 0.0
    %76 = vmatprep.subr.mxu0 0.0
    %77 = vmatpush1.msra.mxu0 0.0
    %78 = vmatprep.subr.mxu0 0.0
    %79 = vmatpush1.msra.mxu0 0.0
    %80 = vmatprep.subr.mxu0 0.0
    %81 = vmatpush1.msra.mxu0 0.0
    %82 = vmatprep.subr.mxu0 0.0
    %83 = vmatpush1.msra.mxu0 0.0
    %84 = vmatprep.subr.mxu0 0.0
    %85 = vmatpush1.msra.mxu0 0.0
    %86 = vmatprep.subr.mxu0 0.0
    %87 = vmatpush1.msra.mxu0 0.0
    %88 = vmatprep.subr.mxu0 0.0
    %89 = vmatpush1.msra.mxu0 0.0
    %90 = vmatprep.subr.mxu0 0.0
    %91 = vmatpush1.msra.mxu0 0.0
    %92 = vmatprep.subr.mxu0 0.0
    %93 = vmatpush1.msra.mxu0 0.0
    %94 = vmatprep.subr.mxu0 0.0
    %95 = vmatpush1.msra.mxu0 0.0
    %96 = vmatprep.subr.mxu0 0.0
    %97 = vmatpush1.msra.mxu0 0.0
    %98 = vmatprep.subr.mxu0 0.0
    %99 = vmatpush1.msra.mxu0 0.0
    %100 = vmatprep.subr.mxu0 0.0
    %101 = vmatpush1.msra.mxu0 0.0
    %102 = vmatprep.subr.mxu0 0.0
    %103 = vmatpush1.msra.mxu0 0.0
    %104 = vmatprep.subr.mxu0 0.0
    %105 = vmatpush1.msra.mxu0 0.0
    %106 = vmatprep.subr.mxu0 0.0
    %107 = vmatpush1.msra.mxu0 0.0
    %108 = vmatprep.subr.mxu0 0.0
    %109 = vmatpush1.msra.mxu0 0.0
    %110 = vmatprep.subr.mxu0 0.0
    %111 = vmatpush1.msra.mxu0 0.0
    %112 = vmatprep.subr.mxu0 0.0
    %113 = vmatpush1.msra.mxu0 0.0
    %114 = vmatprep.subr.mxu0 0.0
    %115 = vmatpush1.msra.mxu0 0.0
    %116 = vmatprep.subr.mxu0 0.0
    %117 = vmatpush1.msra.mxu0 0.0
    %118 = vmatprep.subr.mxu0 0.0
    %119 = vmatpush1.msra.mxu0 0.0
    %120 = vmatprep.subr.mxu0 0.0
    %121 = vmatpush1.msra.mxu0 0.0
    %122 = vmatprep.mubr.f32.mxu0 0.0
    %123 = vmatmul.mubr.f32.gmra.mrb[0].mxu0 %v56
    %v124 = vpop.f32.mrb[0].mxu0
    %v125 = vadd.f32 %v53, %v124
    %v126 = vpop.f32.mrb[0].mxu0
    %127 = vdwg.mxu0
    %v128 = vmax.f32 %v125, 0.0
    %v129 = vld [vmem:[%s2 + $0x1] sm:$0x1]
    %v130 = vlaneseq
    %v131 = vshrl.u32 %v130, 7
    %v132 = vsub.s32 0, %v131
    %v133 = vrot.slane %v129, %v132
    %v134 = vmul.f32 %v128, %v133
    %135 = vadd.xlane.f32.xlu0 %v134
    %v136 = vpop.xlane.xlu0 %135
    %v137 = vld [vmem:[#allocation2] sm:$0x1]
    %139 = vset.pattern.permute.xlu0 0
    %140 = vperm.xlu0 %139, %v137
    %v141 = vpop.permute.xlu0 %140
    %v143 = vlaneseq
    %v144 = vshrl.u32 %v143, 7
    %v145 = vsub.s32 0, %v144
    %v146 = vrot.slane %v141, %v145
    %v147 = vadd.f32 %v136, %v146
    %v149 = vlaneseq
    %v150 = vand.u32 %v149, 127
    %v151 = vlaneseq
    %v152 = vshrl.u32 %v151, 7
    %v153 = vsub.s32 %v150, %v152
    %v154 = vrot.slane %v147, %v153
    %vm156 = vcmask 57344
    %157 = vst.msk [vmem:[#allocation8] sm:$0x1] %vm156, %v154
    // Predicated region
    $region26: #{tpu_custom_call.1} parent=1 // pred_check
      _
    $region27: #{tpu_custom_call.1} parent=1 // pred_check_branch
      %159 = sbr.rel (0) target = $region29
    $region28: #{tpu_custom_call.1} parent=1 // pred_region
      %s161 = ssub.s32 16, 16
      %162 = vsyncadd [#allocation5], %s161
      %s164 = sshll.u32 [#allocation8], 4
      %s165 = int_to_ptr.vmem [resolvable:$true] %s164
      %167 = dma.vmem_to_hbm [thread:$0]  %s165, 16, %s4, [#allocation5]
    $region29: #{tpu_custom_call.1} parent=1 // pred_fallthru
      _
    // Predicated region
    $region30: #{tpu_custom_call.1} parent=1 // pred_check
      _
    $region31: #{tpu_custom_call.1} parent=1 // pred_check_branch
      %169 = sbr.rel (0) target = $region33
    $region32: #{tpu_custom_call.1} parent=1 // pred_region
      %170 = dma.done [#allocation5], 16
    $region33: #{tpu_custom_call.1} parent=1 // pred_fallthru
      _
    %171 = vsyncpa [#allocation4], 1
    %172 = vsyncpa [#allocation7], 1
    %173 = vsyncpa [#allocation5], 1

</llo_original>
